<compile_context>
chip_gen: v7x
topology: tpu7x:2x2x1
jax: 0.10.0
libtpu: 0.0.40
codegen_flags: <defaults>
</compile_context>

<pallas_src>
import functools

import jax
import jax.numpy as jnp
from jax.experimental import pallas as pl
from jax.experimental.pallas import tpu as pltpu


def vae_kernel(
    x_ref,          # (TB, D)   bf16
    eps_ref,        # (TB, L)   f32
    w_in_ref,       # (D, H)    bf16  encoder layer 1
    w_hid_ref,      # (4, H, H) bf16  [enc2, enc3, dec2, dec3]
    w_head_ref,     # (H, 2L)   bf16  folded enc4 @ [mean | logvar] head
    w_dec_in_ref,   # (L, H)    bf16  decoder layer 1
    w_dec_out_ref,  # (H, D)    bf16  decoder layer 4
    b_ref,          # (8, Fmax) f32   packed biases (row per layer)
    out_ref,        # (TB, OUT_PAD) f32  packed [x_hat | mu | logvar | 0-pad]
    *, hidden_dim, latent_dim, input_dim, out_pad,
):
    H, L, D = hidden_dim, latent_dim, input_dim
    bf16 = jnp.bfloat16

    def linear(h_bf16, w, bias_row, width):
        # bf16 MXU matmul, f32 accumulate, f32 bias add on the VPU.
        acc = jnp.dot(h_bf16, w, preferred_element_type=jnp.float32)
        return acc + b_ref[bias_row:bias_row + 1, :width]

    relu_bf16 = lambda v: jnp.maximum(v, 0.0).astype(bf16)

    x = x_ref[...]                                   # (TB, D) bf16

    # ---- encoder ----
    h = linear(x, w_in_ref[...], 0, H)
    h = jnp.maximum(h, 0.2 * h).astype(bf16)         # LeakyReLU(0.2)
    h = relu_bf16(linear(h, w_hid_ref[0], 1, H))
    h = relu_bf16(linear(h, w_hid_ref[1], 2, H))

    # ---- folded (encoder-4 + [mu|logvar]) head + reparameterization ----
    ml = linear(h, w_head_ref[...], 3, 2 * L)        # (TB, 2L) f32 = [mu|logvar]
    mu = ml[:, :L]
    logvar = ml[:, L:]
    z = mu + jnp.exp(0.5 * logvar) * eps_ref[...]    # exp lands on the EUP

    # ---- decoder ----
    d = relu_bf16(linear(z.astype(bf16), w_dec_in_ref[...], 4, H))
    d = relu_bf16(linear(d, w_hid_ref[2], 5, H))
    d = relu_bf16(linear(d, w_hid_ref[3], 6, H))
    x_hat = linear(d, w_dec_out_ref[...], 7, D)      # (TB, D) f32, no activation

    # ---- single lane-dense packed store ----
    tb = x_hat.shape[0]
    pad = out_pad - (D + 2 * L)
    pieces = [x_hat, ml]
    if pad:
        pieces.append(jnp.zeros((tb, pad), jnp.float32))
    out_ref[...] = jnp.concatenate(pieces, axis=-1)


def _nbytes(a):
    return a.size * a.dtype.itemsize


def vae_forward(x, eps, params, *, block_b=None):
    """params: dict of per-layer weights (in, out) bf16 and biases (1, out) f32."""
    B, input_dim = x.shape
    latent_dim = eps.shape[1]
    hidden_dim = params["ew1"].shape[1]
    if block_b is None:
        block_b = B                                   # grid=(1,) at these sizes
    assert B % block_b == 0, "demo wrapper assumes B divisible by block_b"

    f32 = jnp.float32
    bf16 = jnp.bfloat16

    # --- fold the activation-free encoder layer 4 into the [mu|logvar] head ---
    # Done in f32 (then cast to bf16) to avoid compounding bf16 rounding.
    w_head_raw = jnp.concatenate(
        [params["wm"].astype(f32), params["wl"].astype(f32)], axis=1)  # (H, 2L)
    b_head_raw = jnp.concatenate([params["bm"], params["bl"]], axis=1)  # (1, 2L)
    w_head_fold = params["ew4"].astype(f32) @ w_head_raw                # (H, 2L)
    b_head_fold = params["eb4"].astype(f32) @ w_head_raw + b_head_raw   # (1, 2L)

    w_in = params["ew1"].astype(bf16)
    w_hid = jnp.stack([params[k].astype(bf16)
                       for k in ("ew2", "ew3", "dw2", "dw3")])          # (4, H, H)
    w_head = w_head_fold.astype(bf16)
    w_dec_in = params["dw1"].astype(bf16)
    w_dec_out = params["dw4"].astype(bf16)

    # Pack the 8 bias rows (3 encoder, 1 folded head, 4 decoder) into one array.
    fmax = max(hidden_dim, 2 * latent_dim, input_dim)

    def pad_row(b):
        b = b.astype(f32)
        return jnp.pad(b, ((0, 0), (0, fmax - b.shape[1])))

    biases = jnp.concatenate(
        [pad_row(params["eb1"]), pad_row(params["eb2"]), pad_row(params["eb3"]),
         pad_row(b_head_fold),
         pad_row(params["db1"]), pad_row(params["db2"]), pad_row(params["db3"]),
         pad_row(params["db4"])],
        axis=0)                                                 # (8, Fmax) f32

    # Lane-dense packed output width (multiple of 128).
    packed_width = input_dim + 2 * latent_dim
    out_pad = pl.cdiv(packed_width, 128) * 128

    kernel = functools.partial(
        vae_kernel, hidden_dim=hidden_dim, latent_dim=latent_dim,
        input_dim=input_dim, out_pad=out_pad)

    grid = (pl.cdiv(B, block_b),)

    def batch_spec(feat):
        return pl.BlockSpec((block_b, feat), lambda i: (i, 0))

    def const_spec(shape):
        # Grid-invariant operand: resident in VMEM, single-buffered.
        if len(shape) == 3:
            imap = lambda i: (0, 0, 0)
        else:
            imap = lambda i: (0, 0)
        return pl.BlockSpec(shape, imap, pipeline_mode=pl.Buffered(1))

    x_b = x.astype(bf16)
    eps_f = eps.astype(f32)

    in_specs = (
        batch_spec(input_dim),                                 # x (bf16)
        batch_spec(latent_dim),                                # eps (f32)
        const_spec(w_in.shape),
        const_spec(w_hid.shape),
        const_spec(w_head.shape),
        const_spec(w_dec_in.shape),
        const_spec(w_dec_out.shape),
        const_spec(biases.shape),
    )
    out_specs = batch_spec(out_pad)
    out_shape = jax.ShapeDtypeStruct((B, out_pad), jnp.float32)

    layer_dims = (
        [(input_dim, hidden_dim)] + [(hidden_dim, hidden_dim)] * 2
        + [(hidden_dim, 2 * latent_dim), (latent_dim, hidden_dim)]
        + [(hidden_dim, hidden_dim)] * 2 + [(hidden_dim, input_dim)]
    )
    flops = 2 * B * sum(fi * fo for fi, fo in layer_dims)
    weight_bytes = sum(_nbytes(a) for a in
                       (w_in, w_hid, w_head, w_dec_in, w_dec_out, biases))
    out_bytes = B * out_pad * 4
    cost = pl.CostEstimate(
        flops=flops,
        transcendentals=B * latent_dim,
        bytes_accessed=_nbytes(x_b) + _nbytes(eps_f) + weight_bytes + out_bytes,
    )

    packed = pl.pallas_call(
        kernel,
        out_shape=out_shape,
        grid=grid,
        in_specs=in_specs,
        out_specs=out_specs,
        cost_estimate=cost,
        compiler_params=pltpu.CompilerParams(
            dimension_semantics=("parallel",),
        ),
    )(x_b, eps_f, w_in, w_hid, w_head, w_dec_in, w_dec_out, biases)

    x_hat = packed[:, :input_dim]
    ml = packed[:, input_dim:packed_width]
    mu = ml[:, :latent_dim]
    logvar = ml[:, latent_dim:]
    return x_hat, mu, logvar


def init_params(key, input_dim, hidden_dim, latent_dim):
    """Deterministic synthetic init; weights (in, out) bf16, biases (1, out) f32."""
    keys = jax.random.split(key, 20)
    k = iter(keys)

    def lin(fan_in, fan_out):
        bound = fan_in ** -0.5
        w = jax.random.uniform(next(k), (fan_in, fan_out), jnp.float32,
                               -bound, bound)
        b = jax.random.uniform(next(k), (1, fan_out), jnp.float32,
                               -bound, bound)
        return w.astype(jnp.bfloat16), b

    p = {}
    p["ew1"], p["eb1"] = lin(input_dim, hidden_dim)
    p["ew2"], p["eb2"] = lin(hidden_dim, hidden_dim)
    p["ew3"], p["eb3"] = lin(hidden_dim, hidden_dim)
    p["ew4"], p["eb4"] = lin(hidden_dim, hidden_dim)
    p["wm"], p["bm"] = lin(hidden_dim, latent_dim)
    p["wl"], p["bl"] = lin(hidden_dim, latent_dim)
    p["dw1"], p["db1"] = lin(latent_dim, hidden_dim)
    p["dw2"], p["db2"] = lin(hidden_dim, hidden_dim)
    p["dw3"], p["db3"] = lin(hidden_dim, hidden_dim)
    p["dw4"], p["db4"] = lin(hidden_dim, input_dim)
    return p


def vae_ref(x, eps, p):
    """Pure-JAX reference matching the original (un-folded) module structure."""
    f32 = lambda a: a.astype(jnp.float32)
    lrelu = lambda v: jnp.maximum(v, 0.2 * v)
    relu = lambda v: jnp.maximum(v, 0.0)
    h = lrelu(x @ f32(p["ew1"]) + p["eb1"])
    h = relu(h @ f32(p["ew2"]) + p["eb2"])
    h = relu(h @ f32(p["ew3"]) + p["eb3"])
    h = h @ f32(p["ew4"]) + p["eb4"]
    mu = h @ f32(p["wm"]) + p["bm"]
    logvar = h @ f32(p["wl"]) + p["bl"]
    z = mu + jnp.exp(0.5 * logvar) * eps
    d = relu(z @ f32(p["dw1"]) + p["db1"])
    d = relu(d @ f32(p["dw2"]) + p["db2"])
    d = relu(d @ f32(p["dw3"]) + p["db3"])
    x_hat = d @ f32(p["dw4"]) + p["db4"]
    return x_hat, mu, logvar


if __name__ == "__main__":
    input_dim, hidden_dim, latent_dim = 64, 32, 16
    batch = 16

    root = jax.random.PRNGKey(0)
    k_x, k_eps, k_params = jax.random.split(root, 3)

    x = jax.random.normal(k_x, (batch, input_dim), jnp.float32)
    eps = jax.random.normal(k_eps, (batch, latent_dim), jnp.float32)
    params = init_params(k_params, input_dim, hidden_dim, latent_dim)

    # block_b=None -> full-batch tile, grid=(1,): one step amortizes all
    # per-step overhead at these toy shapes.
    x_hat, mu, logvar = jax.block_until_ready(vae_forward(x, eps, params))

    # Correctness vs. pure-JAX reference (tolerance loosened for bf16 matmuls
    # and the f32-then-bf16 folded head).
    rx, rmu, rlv = vae_ref(x, eps, params)
    assert jnp.allclose(mu, rmu, atol=5e-2, rtol=5e-2)
    assert jnp.allclose(logvar, rlv, atol=5e-2, rtol=5e-2)
    assert jnp.allclose(x_hat, rx, atol=5e-2, rtol=5e-2)

    print("KERNEL_OK")
</pallas_src>

<mosaic_0001>
module attributes {stable_mosaic.version = 11 : i64} {
  func.func @vae_kernel(%arg0: i32, %arg1: memref<16x64xbf16, #tpu.memory_space<vmem>>, %arg2: memref<16x16xf32, #tpu.memory_space<vmem>>, %arg3: memref<64x32xbf16, #tpu.memory_space<vmem>>, %arg4: memref<4x32x32xbf16, #tpu.memory_space<vmem>>, %arg5: memref<32x32xbf16, #tpu.memory_space<vmem>>, %arg6: memref<16x32xbf16, #tpu.memory_space<vmem>>, %arg7: memref<32x64xbf16, #tpu.memory_space<vmem>>, %arg8: memref<8x64xf32, #tpu.memory_space<vmem>>, %arg9: memref<16x128xf32, #tpu.memory_space<vmem>>) attributes {dimension_semantics = [#tpu.dimension_semantics<parallel>], iteration_bounds = array<i64: 1>, scalar_prefetch = 0 : i64, scratch_operands = 0 : i64, tpu.core_type = #tpu.core_type<tc>, window_params = [{transform_indices = @transform_0, window_bounds = array<i64: 16, 64>}, {transform_indices = @transform_1, window_bounds = array<i64: 16, 16>}, {pipeline_mode = #tpu.pipeline_mode<synchronous>, transform_indices = @transform_2, window_bounds = array<i64: 64, 32>}, {pipeline_mode = #tpu.pipeline_mode<synchronous>, transform_indices = @transform_3, window_bounds = array<i64: 4, 32, 32>}, {pipeline_mode = #tpu.pipeline_mode<synchronous>, transform_indices = @transform_4, window_bounds = array<i64: 32, 32>}, {pipeline_mode = #tpu.pipeline_mode<synchronous>, transform_indices = @transform_5, window_bounds = array<i64: 16, 32>}, {pipeline_mode = #tpu.pipeline_mode<synchronous>, transform_indices = @transform_6, window_bounds = array<i64: 32, 64>}, {pipeline_mode = #tpu.pipeline_mode<synchronous>, transform_indices = @transform_7, window_bounds = array<i64: 8, 64>}, {transform_indices = @transform_8, window_bounds = array<i64: 16, 128>}]} {
    %c0 = arith.constant 0 : index
    %c0_0 = arith.constant 0 : index
    %0 = vector.load %arg1[%c0, %c0_0] : memref<16x64xbf16, #tpu.memory_space<vmem>>, vector<16x64xbf16>
    %c0_1 = arith.constant 0 : index
    %c0_2 = arith.constant 0 : index
    %1 = vector.load %arg3[%c0_1, %c0_2] : memref<64x32xbf16, #tpu.memory_space<vmem>>, vector<64x32xbf16>
    %cst = arith.constant dense<0.000000e+00> : vector<16x32xf32>
    %2 = tpu.matmul %0, %1, %cst {dimension_numbers = #tpu.dot_dimension_numbers<[1], [0], [0], [1], [0, 0, 1, 1], [], []>} : vector<16x64xbf16>, vector<64x32xbf16>, vector<16x32xf32> -> vector<16x32xf32>
    %c0_3 = arith.constant 0 : index
    %c0_4 = arith.constant 0 : index
    %3 = vector.load %arg8[%c0_3, %c0_4] : memref<8x64xf32, #tpu.memory_space<vmem>>, vector<1x32xf32>
    %4 = vector.broadcast %3 : vector<1x32xf32> to vector<16x32xf32>
    %5 = arith.addf %2, %4 : vector<16x32xf32>
    %cst_5 = arith.constant 2.000000e-01 : f32
    %6 = vector.broadcast %cst_5 : f32 to vector<16x32xf32>
    %7 = arith.mulf %6, %5 : vector<16x32xf32>
    %8 = arith.maximumf %5, %7 : vector<16x32xf32>
    %9 = arith.truncf %8 : vector<16x32xf32> to vector<16x32xbf16>
    %c0_6 = arith.constant 0 : index
    %c0_7 = arith.constant 0 : index
    %c0_8 = arith.constant 0 : index
    %10 = vector.load %arg4[%c0_6, %c0_7, %c0_8] : memref<4x32x32xbf16, #tpu.memory_space<vmem>>, vector<1x32x32xbf16>
    %11 = vector.shape_cast %10 : vector<1x32x32xbf16> to vector<32x32xbf16>
    %cst_9 = arith.constant dense<0.000000e+00> : vector<16x32xf32>
    %12 = tpu.matmul %9, %11, %cst_9 {dimension_numbers = #tpu.dot_dimension_numbers<[1], [0], [0], [1], [0, 0, 1, 1], [], []>} : vector<16x32xbf16>, vector<32x32xbf16>, vector<16x32xf32> -> vector<16x32xf32>
    %c1 = arith.constant 1 : index
    %c0_10 = arith.constant 0 : index
    %13 = vector.load %arg8[%c1, %c0_10] : memref<8x64xf32, #tpu.memory_space<vmem>>, vector<1x32xf32>
    %14 = vector.broadcast %13 : vector<1x32xf32> to vector<16x32xf32>
    %15 = arith.addf %12, %14 : vector<16x32xf32>
    %cst_11 = arith.constant 0.000000e+00 : f32
    %16 = vector.broadcast %cst_11 : f32 to vector<16x32xf32>
    %17 = arith.maximumf %15, %16 : vector<16x32xf32>
    %18 = arith.truncf %17 : vector<16x32xf32> to vector<16x32xbf16>
    %c1_12 = arith.constant 1 : index
    %c0_13 = arith.constant 0 : index
    %c0_14 = arith.constant 0 : index
    %19 = vector.load %arg4[%c1_12, %c0_13, %c0_14] : memref<4x32x32xbf16, #tpu.memory_space<vmem>>, vector<1x32x32xbf16>
    %20 = vector.shape_cast %19 : vector<1x32x32xbf16> to vector<32x32xbf16>
    %cst_15 = arith.constant dense<0.000000e+00> : vector<16x32xf32>
    %21 = tpu.matmul %18, %20, %cst_15 {dimension_numbers = #tpu.dot_dimension_numbers<[1], [0], [0], [1], [0, 0, 1, 1], [], []>} : vector<16x32xbf16>, vector<32x32xbf16>, vector<16x32xf32> -> vector<16x32xf32>
    %c2 = arith.constant 2 : index
    %c0_16 = arith.constant 0 : index
    %22 = vector.load %arg8[%c2, %c0_16] : memref<8x64xf32, #tpu.memory_space<vmem>>, vector<1x32xf32>
    %23 = vector.broadcast %22 : vector<1x32xf32> to vector<16x32xf32>
    %24 = arith.addf %21, %23 : vector<16x32xf32>
    %cst_17 = arith.constant 0.000000e+00 : f32
    %25 = vector.broadcast %cst_17 : f32 to vector<16x32xf32>
    %26 = arith.maximumf %24, %25 : vector<16x32xf32>
    %27 = arith.truncf %26 : vector<16x32xf32> to vector<16x32xbf16>
    %c0_18 = arith.constant 0 : index
    %c0_19 = arith.constant 0 : index
    %28 = vector.load %arg5[%c0_18, %c0_19] : memref<32x32xbf16, #tpu.memory_space<vmem>>, vector<32x32xbf16>
    %cst_20 = arith.constant dense<0.000000e+00> : vector<16x32xf32>
    %29 = tpu.matmul %27, %28, %cst_20 {dimension_numbers = #tpu.dot_dimension_numbers<[1], [0], [0], [1], [0, 0, 1, 1], [], []>} : vector<16x32xbf16>, vector<32x32xbf16>, vector<16x32xf32> -> vector<16x32xf32>
    %c3 = arith.constant 3 : index
    %c0_21 = arith.constant 0 : index
    %30 = vector.load %arg8[%c3, %c0_21] : memref<8x64xf32, #tpu.memory_space<vmem>>, vector<1x32xf32>
    %31 = vector.broadcast %30 : vector<1x32xf32> to vector<16x32xf32>
    %32 = arith.addf %29, %31 : vector<16x32xf32>
    %33 = vector.extract_strided_slice %32 {offsets = [0, 0], sizes = [16, 16], strides = [1, 1]} : vector<16x32xf32> to vector<16x16xf32>
    %34 = vector.extract_strided_slice %32 {offsets = [0, 16], sizes = [16, 16], strides = [1, 1]} : vector<16x32xf32> to vector<16x16xf32>
    %cst_22 = arith.constant 5.000000e-01 : f32
    %35 = vector.broadcast %cst_22 : f32 to vector<16x16xf32>
    %36 = arith.mulf %35, %34 : vector<16x16xf32>
    %37 = math.exp %36 : vector<16x16xf32>
    %c0_23 = arith.constant 0 : index
    %c0_24 = arith.constant 0 : index
    %38 = vector.load %arg2[%c0_23, %c0_24] : memref<16x16xf32, #tpu.memory_space<vmem>>, vector<16x16xf32>
    %39 = arith.mulf %37, %38 : vector<16x16xf32>
    %40 = arith.addf %33, %39 : vector<16x16xf32>
    %41 = arith.truncf %40 : vector<16x16xf32> to vector<16x16xbf16>
    %c0_25 = arith.constant 0 : index
    %c0_26 = arith.constant 0 : index
    %42 = vector.load %arg6[%c0_25, %c0_26] : memref<16x32xbf16, #tpu.memory_space<vmem>>, vector<16x32xbf16>
    %cst_27 = arith.constant dense<0.000000e+00> : vector<16x32xf32>
    %43 = tpu.matmul %41, %42, %cst_27 {dimension_numbers = #tpu.dot_dimension_numbers<[1], [0], [0], [1], [0, 0, 1, 1], [], []>} : vector<16x16xbf16>, vector<16x32xbf16>, vector<16x32xf32> -> vector<16x32xf32>
    %c4 = arith.constant 4 : index
    %c0_28 = arith.constant 0 : index
    %44 = vector.load %arg8[%c4, %c0_28] : memref<8x64xf32, #tpu.memory_space<vmem>>, vector<1x32xf32>
    %45 = vector.broadcast %44 : vector<1x32xf32> to vector<16x32xf32>
    %46 = arith.addf %43, %45 : vector<16x32xf32>
    %cst_29 = arith.constant 0.000000e+00 : f32
    %47 = vector.broadcast %cst_29 : f32 to vector<16x32xf32>
    %48 = arith.maximumf %46, %47 : vector<16x32xf32>
    %49 = arith.truncf %48 : vector<16x32xf32> to vector<16x32xbf16>
    %c2_30 = arith.constant 2 : index
    %c0_31 = arith.constant 0 : index
    %c0_32 = arith.constant 0 : index
    %50 = vector.load %arg4[%c2_30, %c0_31, %c0_32] : memref<4x32x32xbf16, #tpu.memory_space<vmem>>, vector<1x32x32xbf16>
    %51 = vector.shape_cast %50 : vector<1x32x32xbf16> to vector<32x32xbf16>
    %cst_33 = arith.constant dense<0.000000e+00> : vector<16x32xf32>
    %52 = tpu.matmul %49, %51, %cst_33 {dimension_numbers = #tpu.dot_dimension_numbers<[1], [0], [0], [1], [0, 0, 1, 1], [], []>} : vector<16x32xbf16>, vector<32x32xbf16>, vector<16x32xf32> -> vector<16x32xf32>
    %c5 = arith.constant 5 : index
    %c0_34 = arith.constant 0 : index
    %53 = vector.load %arg8[%c5, %c0_34] : memref<8x64xf32, #tpu.memory_space<vmem>>, vector<1x32xf32>
    %54 = vector.broadcast %53 : vector<1x32xf32> to vector<16x32xf32>
    %55 = arith.addf %52, %54 : vector<16x32xf32>
    %cst_35 = arith.constant 0.000000e+00 : f32
    %56 = vector.broadcast %cst_35 : f32 to vector<16x32xf32>
    %57 = arith.maximumf %55, %56 : vector<16x32xf32>
    %58 = arith.truncf %57 : vector<16x32xf32> to vector<16x32xbf16>
    %c3_36 = arith.constant 3 : index
    %c0_37 = arith.constant 0 : index
    %c0_38 = arith.constant 0 : index
    %59 = vector.load %arg4[%c3_36, %c0_37, %c0_38] : memref<4x32x32xbf16, #tpu.memory_space<vmem>>, vector<1x32x32xbf16>
    %60 = vector.shape_cast %59 : vector<1x32x32xbf16> to vector<32x32xbf16>
    %cst_39 = arith.constant dense<0.000000e+00> : vector<16x32xf32>
    %61 = tpu.matmul %58, %60, %cst_39 {dimension_numbers = #tpu.dot_dimension_numbers<[1], [0], [0], [1], [0, 0, 1, 1], [], []>} : vector<16x32xbf16>, vector<32x32xbf16>, vector<16x32xf32> -> vector<16x32xf32>
    %c6 = arith.constant 6 : index
    %c0_40 = arith.constant 0 : index
    %62 = vector.load %arg8[%c6, %c0_40] : memref<8x64xf32, #tpu.memory_space<vmem>>, vector<1x32xf32>
    %63 = vector.broadcast %62 : vector<1x32xf32> to vector<16x32xf32>
    %64 = arith.addf %61, %63 : vector<16x32xf32>
    %cst_41 = arith.constant 0.000000e+00 : f32
    %65 = vector.broadcast %cst_41 : f32 to vector<16x32xf32>
    %66 = arith.maximumf %64, %65 : vector<16x32xf32>
    %67 = arith.truncf %66 : vector<16x32xf32> to vector<16x32xbf16>
    %c0_42 = arith.constant 0 : index
    %c0_43 = arith.constant 0 : index
    %68 = vector.load %arg7[%c0_42, %c0_43] : memref<32x64xbf16, #tpu.memory_space<vmem>>, vector<32x64xbf16>
    %cst_44 = arith.constant dense<0.000000e+00> : vector<16x64xf32>
    %69 = tpu.matmul %67, %68, %cst_44 {dimension_numbers = #tpu.dot_dimension_numbers<[1], [0], [0], [1], [0, 0, 1, 1], [], []>} : vector<16x32xbf16>, vector<32x64xbf16>, vector<16x64xf32> -> vector<16x64xf32>
    %c7 = arith.constant 7 : index
    %c0_45 = arith.constant 0 : index
    %70 = vector.load %arg8[%c7, %c0_45] : memref<8x64xf32, #tpu.memory_space<vmem>>, vector<1x64xf32>
    %71 = vector.broadcast %70 : vector<1x64xf32> to vector<16x64xf32>
    %72 = arith.addf %69, %71 : vector<16x64xf32>
    %cst_46 = arith.constant 0.000000e+00 : f32
    %73 = vector.broadcast %cst_46 : f32 to vector<16x32xf32>
    %74 = tpu.concatenate %72, %32, %73 in 1 : vector<16x64xf32>, vector<16x32xf32>, vector<16x32xf32> -> vector<16x128xf32>
    %c0_47 = arith.constant 0 : index
    %c0_48 = arith.constant 0 : index
    %75 = vector.load %arg9[%c0_47, %c0_48] : memref<16x128xf32, #tpu.memory_space<vmem>>, vector<16x128xf32>
    tpu.vector_store %arg9[%c0_47, %c0_48], %74 {strides = array<i32>} : memref<16x128xf32, #tpu.memory_space<vmem>>, vector<16x128xf32>,
    return
  }
  func.func @transform_0(%arg0: i32) -> (i32, i32) {
    %c0_i32 = arith.constant 0 : i32
    %c0_i32_0 = arith.constant 0 : i32
    return %arg0, %c0_i32 : i32, i32
  }
  func.func @transform_1(%arg0: i32) -> (i32, i32) {
    %c0_i32 = arith.constant 0 : i32
    %c0_i32_0 = arith.constant 0 : i32
    return %arg0, %c0_i32 : i32, i32
  }
  func.func @transform_2(%arg0: i32) -> (i32, i32) {
    %c0_i32 = arith.constant 0 : i32
    %c0_i32_0 = arith.constant 0 : i32
    %c0_i32_1 = arith.constant 0 : i32
    return %c0_i32, %c0_i32_0 : i32, i32
  }
  func.func @transform_3(%arg0: i32) -> (i32, i32, i32) {
    %c0_i32 = arith.constant 0 : i32
    %c0_i32_0 = arith.constant 0 : i32
    %c0_i32_1 = arith.constant 0 : i32
    %c0_i32_2 = arith.constant 0 : i32
    return %c0_i32, %c0_i32_0, %c0_i32_1 : i32, i32, i32
  }
  func.func @transform_4(%arg0: i32) -> (i32, i32) {
    %c0_i32 = arith.constant 0 : i32
    %c0_i32_0 = arith.constant 0 : i32
    %c0_i32_1 = arith.constant 0 : i32
    return %c0_i32, %c0_i32_0 : i32, i32
  }
  func.func @transform_5(%arg0: i32) -> (i32, i32) {
    %c0_i32 = arith.constant 0 : i32
    %c0_i32_0 = arith.constant 0 : i32
    %c0_i32_1 = arith.constant 0 : i32
    return %c0_i32, %c0_i32_0 : i32, i32
  }
  func.func @transform_6(%arg0: i32) -> (i32, i32) {
    %c0_i32 = arith.constant 0 : i32
    %c0_i32_0 = arith.constant 0 : i32
    %c0_i32_1 = arith.constant 0 : i32
    return %c0_i32, %c0_i32_0 : i32, i32
  }
  func.func @transform_7(%arg0: i32) -> (i32, i32) {
    %c0_i32 = arith.constant 0 : i32
    %c0_i32_0 = arith.constant 0 : i32
    %c0_i32_1 = arith.constant 0 : i32
    return %c0_i32, %c0_i32_0 : i32, i32
  }
  func.func @transform_8(%arg0: i32) -> (i32, i32) {
    %c0_i32 = arith.constant 0 : i32
    %c0_i32_0 = arith.constant 0 : i32
    return %arg0, %c0_i32 : i32, i32
  }
}

</mosaic_0001>

<llo_original>
// kernel: tpu_custom_call.1
$region0: #{tpu_custom_call.1}
  #allocation0 [shape = 'u32[]', space=smem, size = 0x4, offset = 0x4, fixed_abs, tag = 'smem constant byte address 0x4 - core index']
  #allocation1 [shape = 'u32[144,128]{1,0:T(1,128)}', space=vmem, size = 0x12000, scoped, tag = 'internal scratch']
  %s0 = inlined_call_operand.hbm [shape: bf16[16,64], index: 0, kind: input, shape index: {}]
  %s1 = inlined_call_operand.vmem [shape: f32[16,16], index: 1, kind: input, shape index: {}]
  %s2 = inlined_call_operand.vmem [shape: bf16[64,32], index: 2, kind: input, shape index: {}]
  %s3 = inlined_call_operand.hbm [shape: bf16[4,32,32], index: 3, kind: input, shape index: {}]
  %s4 = inlined_call_operand.vmem [shape: bf16[32,32], index: 4, kind: input, shape index: {}]
  %s5 = inlined_call_operand.vmem [shape: bf16[16,32], index: 5, kind: input, shape index: {}]
  %s6 = inlined_call_operand.vmem [shape: bf16[32,64], index: 6, kind: input, shape index: {}]
  %s7 = inlined_call_operand.vmem [shape: f32[8,64], index: 7, kind: input, shape index: {}]
  %s8 = inlined_call_operand.hbm [shape: f32[16,128], index: 8, kind: output, shape index: {}]
  %s9 = sld [smem:[#allocation0]]
  $region50: #{tpu_custom_call.1} parent=0
    _
  %s11 = ssub.s32 1, %s9
  %s12 = scalar_select 0, %s11, %s9
  $region1: #{tpu_custom_call.1} parent=0
    #allocation2 [shape = 'u8[4096]{0}', space=vmem, size = 0x1000, scoped, tag = 'input window, operand 0, single buffered']
    #allocation3 [shape = 's32[1]{0}', space=sflag, size = 0x4, scoped, tag = 'scoped memory for tpu_custom_call.1']
    #allocation4 [shape = 's32[1]{0}', space=sflag, size = 0x4, scoped, tag = 'scoped memory for tpu_custom_call.1']
    #allocation5 [shape = 'u8[32768]{0}', space=vmem, size = 0x8000, scoped, tag = 'input window, operand 3, single buffered']
    #allocation6 [shape = 's32[1]{0}', space=sflag, size = 0x4, scoped, tag = 'scoped memory for tpu_custom_call.1']
    #allocation7 [shape = 'u8[8192]{0}', space=vmem, size = 0x2000, scoped, tag = 'output window, operand 0, single buffered']
    %13 = vsyncpa [#allocation3], 0
    %14 = vsyncpa [#allocation6], 0
    %15 = vsyncpa [#allocation4], 0
    // Predicated region
    $region2: #{tpu_custom_call.1} parent=1 // pred_check
      _
    $region3: #{tpu_custom_call.1} parent=1 // pred_check_branch
      %17 = sbr.rel (0) target = $region5
    $region4: #{tpu_custom_call.1} parent=1 // pred_region
      %s19 = ssub.s32 128, 128
      %20 = vsyncadd [#allocation3], %s19
      %s21 = sshll.u32 [#allocation2], 4
      %s22 = int_to_ptr.vmem [resolvable:$true] %s21
      %27 = dma.hbm_to_vmem [thread:$0]  %s0, 128, %s22, [#allocation3], 64, 64, 4
    $region5: #{tpu_custom_call.1} parent=1 // pred_fallthru
      _
    // Predicated region
    $region6: #{tpu_custom_call.1} parent=1 // pred_check
      _
    $region7: #{tpu_custom_call.1} parent=1 // pred_check_branch
      %29 = sbr.rel (0) target = $region9
    $region8: #{tpu_custom_call.1} parent=1 // pred_region
      _
    $region9: #{tpu_custom_call.1} parent=1 // pred_fallthru
      _
    // Predicated region
    $region10: #{tpu_custom_call.1} parent=1 // pred_check
      _
    $region11: #{tpu_custom_call.1} parent=1 // pred_check_branch
      %31 = sbr.rel (0) target = $region13
    $region12: #{tpu_custom_call.1} parent=1 // pred_region
      _
    $region13: #{tpu_custom_call.1} parent=1 // pred_fallthru
      _
    // Predicated region
    $region14: #{tpu_custom_call.1} parent=1 // pred_check
      _
    $region15: #{tpu_custom_call.1} parent=1 // pred_check_branch
      %33 = sbr.rel (0) target = $region17
    $region16: #{tpu_custom_call.1} parent=1 // pred_region
      %s35 = ssub.s32 1024, 1024
      %36 = vsyncadd [#allocation6], %s35
      %s37 = sshll.u32 [#allocation5], 4
      %s38 = int_to_ptr.vmem [resolvable:$true] %s37
      %43 = dma.hbm_to_vmem [thread:$0]  %s3, 1024, %s38, [#allocation6], 64, 64, 4
    $region17: #{tpu_custom_call.1} parent=1 // pred_fallthru
      _
    // Predicated region
    $region18: #{tpu_custom_call.1} parent=1 // pred_check
      _
    $region19: #{tpu_custom_call.1} parent=1 // pred_check_branch
      %45 = sbr.rel (0) target = $region21
    $region20: #{tpu_custom_call.1} parent=1 // pred_region
      _
    $region21: #{tpu_custom_call.1} parent=1 // pred_fallthru
      _
    // Predicated region
    $region22: #{tpu_custom_call.1} parent=1 // pred_check
      _
    $region23: #{tpu_custom_call.1} parent=1 // pred_check_branch
      %47 = sbr.rel (0) target = $region25
    $region24: #{tpu_custom_call.1} parent=1 // pred_region
      _
    $region25: #{tpu_custom_call.1} parent=1 // pred_fallthru
      _
    // Predicated region
    $region26: #{tpu_custom_call.1} parent=1 // pred_check
      _
    $region27: #{tpu_custom_call.1} parent=1 // pred_check_branch
      %49 = sbr.rel (0) target = $region29
    $region28: #{tpu_custom_call.1} parent=1 // pred_region
      _
    $region29: #{tpu_custom_call.1} parent=1 // pred_fallthru
      _
    // Predicated region
    $region30: #{tpu_custom_call.1} parent=1 // pred_check
      _
    $region31: #{tpu_custom_call.1} parent=1 // pred_check_branch
      %51 = sbr.rel (0) target = $region33
    $region32: #{tpu_custom_call.1} parent=1 // pred_region
      _
    $region33: #{tpu_custom_call.1} parent=1 // pred_fallthru
      _
    // Predicated region
    $region34: #{tpu_custom_call.1} parent=1 // pred_check
      _
    $region35: #{tpu_custom_call.1} parent=1 // pred_check_branch
      %53 = sbr.rel (0) target = $region37
    $region36: #{tpu_custom_call.1} parent=1 // pred_region
      %54 = dma.done [#allocation3], 128
    $region37: #{tpu_custom_call.1} parent=1 // pred_fallthru
      _
    // Predicated region
    $region38: #{tpu_custom_call.1} parent=1 // pred_check
      _
    $region39: #{tpu_custom_call.1} parent=1 // pred_check_branch
      %56 = sbr.rel (0) target = $region41
    $region40: #{tpu_custom_call.1} parent=1 // pred_region
      %57 = dma.done [#allocation6], 1024
    $region41: #{tpu_custom_call.1} parent=1 // pred_fallthru
      _
    %v59 = vld [vmem:[#allocation2] sm:$0xf]
    %v60 = vld [vmem:[#allocation2 + $0x4] sm:$0xf]
    %v61 = vld [vmem:[%s2] sm:$0xf]
    %v62 = vld [vmem:[%s2 + $0x4] sm:$0xf]
    %v63 = vld [vmem:[%s2 + $0x8] sm:$0xf]
    %v64 = vld [vmem:[%s2 + $0xc] sm:$0xf]
    %v65 = vld [vmem:[%s2 + $0x10] sm:$0xf]
    %v66 = vld [vmem:[%s2 + $0x14] sm:$0xf]
    %v67 = vld [vmem:[%s2 + $0x18] sm:$0xf]
    %v68 = vld [vmem:[%s2 + $0x1c] sm:$0xf]
    %v69 = vld [vmem:[%s7] sm:$0x1]
    %v70 = vlaneseq
    %v71 = vshrl.u32 %v70, 7
    %v72 = vsub.s32 0, %v71
    %v73 = vrot.slane %v69, %v72
    %v76 = vunpack.c.l.b16 %v59
    %v77 = vunpack.c.l.b16 %v60
    %v78 = vpack.c.b16 %v77, %v76
    %v87 = vunpack.c.l.b16 %v61
    %v88 = vunpack.c.l.b16 %v62
    %v89 = vunpack.c.l.b16 %v63
    %v90 = vunpack.c.l.b16 %v64
    %v91 = vunpack.c.l.b16 %v65
    %v92 = vunpack.c.l.b16 %v66
    %v93 = vunpack.c.l.b16 %v67
    %v94 = vunpack.c.l.b16 %v68
    %v95 = vpack.c.b16 %v88, %v87
    %v96 = vpack.c.b16 %v90, %v89
    %v97 = vpack.c.b16 %v92, %v91
    %v98 = vpack.c.b16 %v94, %v93
    %vm103 = vcmask 523264
    %v105 = vsel %vm103, %v78, 0
    %107 = vmatprep.subr.bf16.mxu0 0
    %108 = vmatpush1.bf16.msra.mxu0 %v95
    %109 = vmatprep.subr.bf16.mxu0 0
    %110 = vmatpush1.bf16.msra.mxu0 %v96
    %111 = vmatprep.subr.bf16.mxu0 0
    %112 = vmatpush1.bf16.msra.mxu0 %v97
    %113 = vmatprep.subr.bf16.mxu0 0
    %114 = vmatpush1.bf16.msra.mxu0 %v98
    %115 = vmatprep.subr.bf16.mxu0 0
    %116 = vmatpush1.bf16.msra.mxu0 0
    %117 = vmatprep.subr.bf16.mxu0 0
    %118 = vmatpush1.bf16.msra.mxu0 0
    %119 = vmatprep.subr.bf16.mxu0 0
    %120 = vmatpush1.bf16.msra.mxu0 0
    %121 = vmatprep.subr.bf16.mxu0 0
    %122 = vmatpush1.bf16.msra.mxu0 0
    %123 = vmatprep.subr.bf16.mxu0 0
    %124 = vmatpush1.bf16.msra.mxu0 0
    %125 = vmatprep.subr.bf16.mxu0 0
    %126 = vmatpush1.bf16.msra.mxu0 0
    %127 = vmatprep.subr.bf16.mxu0 0
    %128 = vmatpush1.bf16.msra.mxu0 0
    %129 = vmatprep.subr.bf16.mxu0 0
    %130 = vmatpush1.bf16.msra.mxu0 0
    %131 = vmatprep.subr.bf16.mxu0 0
    %132 = vmatpush1.bf16.msra.mxu0 0
    %133 = vmatprep.subr.bf16.mxu0 0
    %134 = vmatpush1.bf16.msra.mxu0 0
    %135 = vmatprep.subr.bf16.mxu0 0
    %136 = vmatpush1.bf16.msra.mxu0 0
    %137 = vmatprep.subr.bf16.mxu0 0
    %138 = vmatpush1.bf16.msra.mxu0 0
    %139 = vmatprep.mubr.bf16.mxu0 0
    %140 = vmatmul.mubr.bf16.gmra.mrb[0].mxu0 %v105
    %v141 = vpop.f32.mrb[0].mxu0
    %v142 = vadd.f32 %v73, %v141
    %v143 = vpop.f32.mrb[0].mxu0
    %v144 = vpop.f32.mrb[0].mxu0
    %v145 = vadd.f32 %v73, %v144
    %v146 = vpop.f32.mrb[0].mxu0
    %147 = vdwg.mxu0
    %v148 = vmul.f32 %v142, 0.2
    %v149 = vmul.f32 %v145, 0.2
    %v150 = vmax.f32 %v142, %v148
    %v151 = vmax.f32 %v145, %v149
    %v152 = vpack.c.bf16 %v151, %v150
    %v153 = vld [vmem:[#allocation5] sm:$0xf]
    %v154 = vld [vmem:[#allocation5 + $0x4] sm:$0xf]
    %v155 = vld [vmem:[#allocation5 + $0x8] sm:$0xf]
    %v156 = vld [vmem:[#allocation5 + $0xc] sm:$0xf]
    %v157 = vld [vmem:[%s7 + $0x1] sm:$0x1]
    %v158 = vlaneseq
    %v159 = vshrl.u32 %v158, 7
    %v160 = vsub.s32 0, %v159
    %v161 = vrot.slane %v157, %v160
    %v166 = vunpack.c.l.b16 %v153
    %v167 = vunpack.c.l.b16 %v154
    %v168 = vunpack.c.l.b16 %v155
    %v169 = vunpack.c.l.b16 %v156
    %v170 = vpack.c.b16 %v167, %v166
    %v171 = vpack.c.b16 %v169, %v168
    %vm174 = vcmask 261120
    %v176 = vsel %vm174, %v152, 0
    %178 = vmatprep.subr.bf16.mxu0 0
    %179 = vmatpush1.bf16.msra.mxu0 %v170
    %180 = vmatprep.subr.bf16.mxu0 0
    %181 = vmatpush1.bf16.msra.mxu0 %v171
    %182 = vmatprep.subr.bf16.mxu0 0
    %183 = vmatpush1.bf16.msra.mxu0 0
    %184 = vmatprep.subr.bf16.mxu0 0
    %185 = vmatpush1.bf16.msra.mxu0 0
    %186 = vmatprep.subr.bf16.mxu0 0
    %187 = vmatpush1.bf16.msra.mxu0 0
    %188 = vmatprep.subr.bf16.mxu0 0
    %189 = vmatpush1.bf16.msra.mxu0 0
    %190 = vmatprep.subr.bf16.mxu0 0
    %191 = vmatpush1.bf16.msra.mxu0 0
    %192 = vmatprep.subr.bf16.mxu0 0
    %193 = vmatpush1.bf16.msra.mxu0 0
    %194 = vmatprep.subr.bf16.mxu0 0
    %195 = vmatpush1.bf16.msra.mxu0 0
    %196 = vmatprep.subr.bf16.mxu0 0
    %197 = vmatpush1.bf16.msra.mxu0 0
    %198 = vmatprep.subr.bf16.mxu0 0
    %199 = vmatpush1.bf16.msra.mxu0 0
    %200 = vmatprep.subr.bf16.mxu0 0
    %201 = vmatpush1.bf16.msra.mxu0 0
    %202 = vmatprep.subr.bf16.mxu0 0
    %203 = vmatpush1.bf16.msra.mxu0 0
    %204 = vmatprep.subr.bf16.mxu0 0
    %205 = vmatpush1.bf16.msra.mxu0 0
    %206 = vmatprep.subr.bf16.mxu0 0
    %207 = vmatpush1.bf16.msra.mxu0 0
    %208 = vmatprep.subr.bf16.mxu0 0
    %209 = vmatpush1.bf16.msra.mxu0 0
    %210 = vmatprep.mubr.bf16.mxu0 0
    %211 = vmatmul.mubr.bf16.gmra.mrb[0].mxu0 %v176
    %v212 = vpop.f32.mrb[0].mxu0
    %v213 = vadd.f32 %v161, %v212
    %v214 = vpop.f32.mrb[0].mxu0
    %v215 = vpop.f32.mrb[0].mxu0
    %v216 = vadd.f32 %v161, %v215
    %v217 = vpop.f32.mrb[0].mxu0
    %218 = vdwg.mxu0
    %v219 = vmax.f32 %v213, 0.0
    %v220 = vmax.f32 %v216, 0.0
    %v221 = vpack.c.bf16 %v220, %v219
    %s222 = scalar_lea.vmem [#allocation5], 16
    %v223 = vld [vmem:[%s222] sm:$0xf]
    %v224 = vld [vmem:[%s222 + $0x4] sm:$0xf]
    %v225 = vld [vmem:[%s222 + $0x8] sm:$0xf]
    %v226 = vld [vmem:[%s222 + $0xc] sm:$0xf]
    %v227 = vld [vmem:[%s7 + $0x2] sm:$0x1]
    %v228 = vlaneseq
    %v229 = vshrl.u32 %v228, 7
    %v230 = vsub.s32 0, %v229
    %v231 = vrot.slane %v227, %v230
    %v236 = vunpack.c.l.b16 %v223
    %v237 = vunpack.c.l.b16 %v224
    %v238 = vunpack.c.l.b16 %v225
    %v239 = vunpack.c.l.b16 %v226
    %v240 = vpack.c.b16 %v237, %v236
    %v241 = vpack.c.b16 %v239, %v238
    %v245 = vsel %vm174, %v221, 0
    %247 = vmatprep.subr.bf16.mxu0 0
    %248 = vmatpush1.bf16.msra.mxu0 %v240
    %249 = vmatprep.subr.bf16.mxu0 0
    %250 = vmatpush1.bf16.msra.mxu0 %v241
    %251 = vmatprep.subr.bf16.mxu0 0
    %252 = vmatpush1.bf16.msra.mxu0 0
    %253 = vmatprep.subr.bf16.mxu0 0
    %254 = vmatpush1.bf16.msra.mxu0 0
    %255 = vmatprep.subr.bf16.mxu0 0
    %256 = vmatpush1.bf16.msra.mxu0 0
    %257 = vmatprep.subr.bf16.mxu0 0
    %258 = vmatpush1.bf16.msra.mxu0 0
    %259 = vmatprep.subr.bf16.mxu0 0
    %260 = vmatpush1.bf16.msra.mxu0 0
    %261 = vmatprep.subr.bf16.mxu0 0
    %262 = vmatpush1.bf16.msra.mxu0 0
    %263 = vmatprep.subr.bf16.mxu0 0
    %264 = vmatpush1.bf16.msra.mxu0 0
    %265 = vmatprep.subr.bf16.mxu0 0
    %266 = vmatpush1.bf16.msra.mxu0 0
    %267 = vmatprep.subr.bf16.mxu0 0
    %268 = vmatpush1.bf16.msra.mxu0 0
    %269 = vmatprep.subr.bf16.mxu0 0
    %270 = vmatpush1.bf16.msra.mxu0 0
    %271 = vmatprep.subr.bf16.mxu0 0
    %272 = vmatpush1.bf16.msra.mxu0 0
    %273 = vmatprep.subr.bf16.mxu0 0
    %274 = vmatpush1.bf16.msra.mxu0 0
    %275 = vmatprep.subr.bf16.mxu0 0
    %276 = vmatpush1.bf16.msra.mxu0 0
    %277 = vmatprep.subr.bf16.mxu0 0
    %278 = vmatpush1.bf16.msra.mxu0 0
    %279 = vmatprep.mubr.bf16.mxu0 0
    %280 = vmatmul.mubr.bf16.gmra.mrb[0].mxu0 %v245
    %v281 = vpop.f32.mrb[0].mxu0
    %v282 = vadd.f32 %v231, %v281
    %v283 = vpop.f32.mrb[0].mxu0
    %v284 = vpop.f32.mrb[0].mxu0
    %v285 = vadd.f32 %v231, %v284
    %v286 = vpop.f32.mrb[0].mxu0
    %287 = vdwg.mxu0
    %v288 = vmax.f32 %v282, 0.0
    %v289 = vmax.f32 %v285, 0.0
    %v290 = vpack.c.bf16 %v289, %v288
    %v291 = vld [vmem:[%s4] sm:$0xf]
    %v292 = vld [vmem:[%s4 + $0x4] sm:$0xf]
    %v293 = vld [vmem:[%s4 + $0x8] sm:$0xf]
    %v294 = vld [vmem:[%s4 + $0xc] sm:$0xf]
    %v295 = vld [vmem:[%s7 + $0x3] sm:$0x1]
    %v296 = vlaneseq
    %v297 = vshrl.u32 %v296, 7
    %v298 = vsub.s32 0, %v297
    %v299 = vrot.slane %v295, %v298
    %v304 = vunpack.c.l.b16 %v291
    %v305 = vunpack.c.l.b16 %v292
    %v306 = vunpack.c.l.b16 %v293
    %v307 = vunpack.c.l.b16 %v294
    %v308 = vpack.c.b16 %v305, %v304
    %v309 = vpack.c.b16 %v307, %v306
    %v313 = vsel %vm174, %v290, 0
    %315 = vmatprep.subr.bf16.mxu0 0
    %316 = vmatpush1.bf16.msra.mxu0 %v308
    %317 = vmatprep.subr.bf16.mxu0 0
    %318 = vmatpush1.bf16.msra.mxu0 %v309
    %319 = vmatprep.subr.bf16.mxu0 0
    %320 = vmatpush1.bf16.msra.mxu0 0
    %321 = vmatprep.subr.bf16.mxu0 0
    %322 = vmatpush1.bf16.msra.mxu0 0
    %323 = vmatprep.subr.bf16.mxu0 0
    %324 = vmatpush1.bf16.msra.mxu0 0
    %325 = vmatprep.subr.bf16.mxu0 0
    %326 = vmatpush1.bf16.msra.mxu0 0
    %327 = vmatprep.subr.bf16.mxu0 0
    %328 = vmatpush1.bf16.msra.mxu0 0
    %329 = vmatprep.subr.bf16.mxu0 0
    %330 = vmatpush1.bf16.msra.mxu0 0
    %331 = vmatprep.subr.bf16.mxu0 0
    %332 = vmatpush1.bf16.msra.mxu0 0
    %333 = vmatprep.subr.bf16.mxu0 0
    %334 = vmatpush1.bf16.msra.mxu0 0
    %335 = vmatprep.subr.bf16.mxu0 0
    %336 = vmatpush1.bf16.msra.mxu0 0
    %337 = vmatprep.subr.bf16.mxu0 0
    %338 = vmatpush1.bf16.msra.mxu0 0
    %339 = vmatprep.subr.bf16.mxu0 0
    %340 = vmatpush1.bf16.msra.mxu0 0
    %341 = vmatprep.subr.bf16.mxu0 0
    %342 = vmatpush1.bf16.msra.mxu0 0
    %343 = vmatprep.subr.bf16.mxu0 0
    %344 = vmatpush1.bf16.msra.mxu0 0
    %345 = vmatprep.subr.bf16.mxu0 0
    %346 = vmatpush1.bf16.msra.mxu0 0
    %347 = vmatprep.mubr.bf16.mxu0 0
    %348 = vmatmul.mubr.bf16.gmra.mrb[0].mxu0 %v313
    %v349 = vpop.f32.mrb[0].mxu0
    %v350 = vadd.f32 %v299, %v349
    %v351 = vpop.f32.mrb[0].mxu0
    %v352 = vpop.f32.mrb[0].mxu0
    %v353 = vadd.f32 %v299, %v352
    %v354 = vpop.f32.mrb[0].mxu0
    %355 = vdwg.mxu0
    %v356 = vmul.f32 %v350, 0.5
    %v357 = vmul.f32 %v353, 0.5
    %v358 = vmul.f32 %v356, 1.442695
    %v359 = vpow.pop %v358
    %v360 = vmul.f32 %v357, 1.442695
    %v361 = vpow.pop %v360
    %v362 = vld [vmem:[%s1] sm:$0xff]
    %v363 = vld [vmem:[%s1 + $0x8] sm:$0xff]
    %366 = vrot.lane.b32.xlu0 %v362, 16
    %v367 = vpop.permute.xlu0 %366
    %368 = vrot.lane.b32.xlu0 %v363, 16
    %v369 = vpop.permute.xlu0 %368
    %v372 = vmul.f32 %v359, %v367
    %v373 = vmul.f32 %v361, %v369
    %376 = vrot.lane.b32.xlu0 %v372, 112
    %v377 = vpop.permute.xlu0 %376
    %378 = vrot.lane.b32.xlu0 %v373, 112
    %v379 = vpop.permute.xlu0 %378
    %v382 = vadd.f32 %v350, %v377
    %v383 = vadd.f32 %v353, %v379
    %v384 = vpack.c.bf16 %v383, %v382
    %v385 = vld [vmem:[%s5] sm:$0xf]
    %v386 = vld [vmem:[%s5 + $0x4] sm:$0xf]
    %v387 = vld [vmem:[%s7 + $0x4] sm:$0x1]
    %v388 = vlaneseq
    %v389 = vshrl.u32 %v388, 7
    %v390 = vsub.s32 0, %v389
    %v391 = vrot.slane %v387, %v390
    %v394 = vunpack.c.l.b16 %v385
    %v395 = vunpack.c.l.b16 %v386
    %v396 = vpack.c.b16 %v395, %v394
    %vm398 = vcmask 130048
    %v400 = vsel %vm398, %v384, 0
    %402 = vmatprep.subr.bf16.mxu0 0
    %403 = vmatpush1.bf16.msra.mxu0 %v396
    %404 = vmatprep.subr.bf16.mxu0 0
    %405 = vmatpush1.bf16.msra.mxu0 0
    %406 = vmatprep.subr.bf16.mxu0 0
    %407 = vmatpush1.bf16.msra.mxu0 0
    %408 = vmatprep.subr.bf16.mxu0 0
    %409 = vmatpush1.bf16.msra.mxu0 0
    %410 = vmatprep.subr.bf16.mxu0 0
    %411 = vmatpush1.bf16.msra.mxu0 0
    %412 = vmatprep.subr.bf16.mxu0 0
    %413 = vmatpush1.bf16.msra.mxu0 0
    %414 = vmatprep.subr.bf16.mxu0 0
    %415 = vmatpush1.bf16.msra.mxu0 0
    %416 = vmatprep.subr.bf16.mxu0 0
    %417 = vmatpush1.bf16.msra.mxu0 0
    %418 = vmatprep.subr.bf16.mxu0 0
    %419 = vmatpush1.bf16.msra.mxu0 0
    %420 = vmatprep.subr.bf16.mxu0 0
    %421 = vmatpush1.bf16.msra.mxu0 0
    %422 = vmatprep.subr.bf16.mxu0 0
    %423 = vmatpush1.bf16.msra.mxu0 0
    %424 = vmatprep.subr.bf16.mxu0 0
    %425 = vmatpush1.bf16.msra.mxu0 0
    %426 = vmatprep.subr.bf16.mxu0 0
    %427 = vmatpush1.bf16.msra.mxu0 0
    %428 = vmatprep.subr.bf16.mxu0 0
    %429 = vmatpush1.bf16.msra.mxu0 0
    %430 = vmatprep.subr.bf16.mxu0 0
    %431 = vmatpush1.bf16.msra.mxu0 0
    %432 = vmatprep.subr.bf16.mxu0 0
    %433 = vmatpush1.bf16.msra.mxu0 0
    %434 = vmatprep.mubr.bf16.mxu0 0
    %435 = vmatmul.mubr.bf16.gmra.mrb[0].mxu0 %v400
    %v436 = vpop.f32.mrb[0].mxu0
    %v437 = vadd.f32 %v391, %v436
    %v438 = vpop.f32.mrb[0].mxu0
    %v439 = vpop.f32.mrb[0].mxu0
    %v440 = vadd.f32 %v391, %v439
    %v441 = vpop.f32.mrb[0].mxu0
    %442 = vdwg.mxu0
    %v443 = vmax.f32 %v437, 0.0
    %v444 = vmax.f32 %v440, 0.0
    %v445 = vpack.c.bf16 %v444, %v443
    %s446 = scalar_lea.vmem [#allocation5], 32
    %v447 = vld [vmem:[%s446] sm:$0xf]
    %v448 = vld [vmem:[%s446 + $0x4] sm:$0xf]
    %v449 = vld [vmem:[%s446 + $0x8] sm:$0xf]
    %v450 = vld [vmem:[%s446 + $0xc] sm:$0xf]
    %v451 = vld [vmem:[%s7 + $0x5] sm:$0x1]
    %v452 = vlaneseq
    %v453 = vshrl.u32 %v452, 7
    %v454 = vsub.s32 0, %v453
    %v455 = vrot.slane %v451, %v454
    %v460 = vunpack.c.l.b16 %v447
    %v461 = vunpack.c.l.b16 %v448
    %v462 = vunpack.c.l.b16 %v449
    %v463 = vunpack.c.l.b16 %v450
    %v464 = vpack.c.b16 %v461, %v460
    %v465 = vpack.c.b16 %v463, %v462
    %v469 = vsel %vm174, %v445, 0
    %471 = vmatprep.subr.bf16.mxu0 0
    %472 = vmatpush1.bf16.msra.mxu0 %v464
    %473 = vmatprep.subr.bf16.mxu0 0
    %474 = vmatpush1.bf16.msra.mxu0 %v465
    %475 = vmatprep.subr.bf16.mxu0 0
    %476 = vmatpush1.bf16.msra.mxu0 0
    %477 = vmatprep.subr.bf16.mxu0 0
    %478 = vmatpush1.bf16.msra.mxu0 0
    %479 = vmatprep.subr.bf16.mxu0 0
    %480 = vmatpush1.bf16.msra.mxu0 0
    %481 = vmatprep.subr.bf16.mxu0 0
    %482 = vmatpush1.bf16.msra.mxu0 0
    %483 = vmatprep.subr.bf16.mxu0 0
    %484 = vmatpush1.bf16.msra.mxu0 0
    %485 = vmatprep.subr.bf16.mxu0 0
    %486 = vmatpush1.bf16.msra.mxu0 0
    %487 = vmatprep.subr.bf16.mxu0 0
    %488 = vmatpush1.bf16.msra.mxu0 0
    %489 = vmatprep.subr.bf16.mxu0 0
    %490 = vmatpush1.bf16.msra.mxu0 0
    %491 = vmatprep.subr.bf16.mxu0 0
    %492 = vmatpush1.bf16.msra.mxu0 0
    %493 = vmatprep.subr.bf16.mxu0 0
    %494 = vmatpush1.bf16.msra.mxu0 0
    %495 = vmatprep.subr.bf16.mxu0 0
    %496 = vmatpush1.bf16.msra.mxu0 0
    %497 = vmatprep.subr.bf16.mxu0 0
    %498 = vmatpush1.bf16.msra.mxu0 0
    %499 = vmatprep.subr.bf16.mxu0 0
    %500 = vmatpush1.bf16.msra.mxu0 0
    %501 = vmatprep.subr.bf16.mxu0 0
    %502 = vmatpush1.bf16.msra.mxu0 0
    %503 = vmatprep.mubr.bf16.mxu0 0
    %504 = vmatmul.mubr.bf16.gmra.mrb[0].mxu0 %v469
    %v505 = vpop.f32.mrb[0].mxu0
    %v506 = vadd.f32 %v455, %v505
    %v507 = vpop.f32.mrb[0].mxu0
    %v508 = vpop.f32.mrb[0].mxu0
    %v509 = vadd.f32 %v455, %v508
    %v510 = vpop.f32.mrb[0].mxu0
    %511 = vdwg.mxu0
    %v512 = vmax.f32 %v506, 0.0
    %v513 = vmax.f32 %v509, 0.0
    %v514 = vpack.c.bf16 %v513, %v512
    %s515 = scalar_lea.vmem [#allocation5], 48
    %v516 = vld [vmem:[%s515] sm:$0xf]
    %v517 = vld [vmem:[%s515 + $0x4] sm:$0xf]
    %v518 = vld [vmem:[%s515 + $0x8] sm:$0xf]
    %v519 = vld [vmem:[%s515 + $0xc] sm:$0xf]
    %v520 = vld [vmem:[%s7 + $0x6] sm:$0x1]
    %v521 = vlaneseq
    %v522 = vshrl.u32 %v521, 7
    %v523 = vsub.s32 0, %v522
    %v524 = vrot.slane %v520, %v523
    %v529 = vunpack.c.l.b16 %v516
    %v530 = vunpack.c.l.b16 %v517
    %v531 = vunpack.c.l.b16 %v518
    %v532 = vunpack.c.l.b16 %v519
    %v533 = vpack.c.b16 %v530, %v529
    %v534 = vpack.c.b16 %v532, %v531
    %v538 = vsel %vm174, %v514, 0
    %540 = vmatprep.subr.bf16.mxu0 0
    %541 = vmatpush1.bf16.msra.mxu0 %v533
    %542 = vmatprep.subr.bf16.mxu0 0
    %543 = vmatpush1.bf16.msra.mxu0 %v534
    %544 = vmatprep.subr.bf16.mxu0 0
    %545 = vmatpush1.bf16.msra.mxu0 0
    %546 = vmatprep.subr.bf16.mxu0 0
    %547 = vmatpush1.bf16.msra.mxu0 0
    %548 = vmatprep.subr.bf16.mxu0 0
    %549 = vmatpush1.bf16.msra.mxu0 0
    %550 = vmatprep.subr.bf16.mxu0 0
    %551 = vmatpush1.bf16.msra.mxu0 0
    %552 = vmatprep.subr.bf16.mxu0 0
    %553 = vmatpush1.bf16.msra.mxu0 0
    %554 = vmatprep.subr.bf16.mxu0 0
    %555 = vmatpush1.bf16.msra.mxu0 0
    %556 = vmatprep.subr.bf16.mxu0 0
    %557 = vmatpush1.bf16.msra.mxu0 0
    %558 = vmatprep.subr.bf16.mxu0 0
    %559 = vmatpush1.bf16.msra.mxu0 0
    %560 = vmatprep.subr.bf16.mxu0 0
    %561 = vmatpush1.bf16.msra.mxu0 0
    %562 = vmatprep.subr.bf16.mxu0 0
    %563 = vmatpush1.bf16.msra.mxu0 0
    %564 = vmatprep.subr.bf16.mxu0 0
    %565 = vmatpush1.bf16.msra.mxu0 0
    %566 = vmatprep.subr.bf16.mxu0 0
    %567 = vmatpush1.bf16.msra.mxu0 0
    %568 = vmatprep.subr.bf16.mxu0 0
    %569 = vmatpush1.bf16.msra.mxu0 0
    %570 = vmatprep.subr.bf16.mxu0 0
    %571 = vmatpush1.bf16.msra.mxu0 0
    %572 = vmatprep.mubr.bf16.mxu0 0
    %573 = vmatmul.mubr.bf16.gmra.mrb[0].mxu0 %v538
    %v574 = vpop.f32.mrb[0].mxu0
    %v575 = vadd.f32 %v524, %v574
    %v576 = vpop.f32.mrb[0].mxu0
    %v577 = vpop.f32.mrb[0].mxu0
    %v578 = vadd.f32 %v524, %v577
    %v579 = vpop.f32.mrb[0].mxu0
    %580 = vdwg.mxu0
    %v581 = vmax.f32 %v575, 0.0
    %v582 = vmax.f32 %v578, 0.0
    %v583 = vpack.c.bf16 %v582, %v581
    %v584 = vld [vmem:[%s6] sm:$0xf]
    %v585 = vld [vmem:[%s6 + $0x4] sm:$0xf]
    %v586 = vld [vmem:[%s6 + $0x8] sm:$0xf]
    %v587 = vld [vmem:[%s6 + $0xc] sm:$0xf]
    %v588 = vld [vmem:[%s7 + $0x7] sm:$0x1]
    %v589 = vlaneseq
    %v590 = vshrl.u32 %v589, 7
    %v591 = vsub.s32 0, %v590
    %v592 = vrot.slane %v588, %v591
    %v597 = vunpack.c.l.b16 %v584
    %v598 = vunpack.c.l.b16 %v585
    %v599 = vunpack.c.l.b16 %v586
    %v600 = vunpack.c.l.b16 %v587
    %v601 = vpack.c.b16 %v598, %v597
    %v602 = vpack.c.b16 %v600, %v599
    %v606 = vsel %vm174, %v583, 0
    %608 = vmatprep.subr.bf16.mxu0 0
    %609 = vmatpush1.bf16.msra.mxu0 %v601
    %610 = vmatprep.subr.bf16.mxu0 0
    %611 = vmatpush1.bf16.msra.mxu0 %v602
    %612 = vmatprep.subr.bf16.mxu0 0
    %613 = vmatpush1.bf16.msra.mxu0 0
    %614 = vmatprep.subr.bf16.mxu0 0
    %615 = vmatpush1.bf16.msra.mxu0 0
    %616 = vmatprep.subr.bf16.mxu0 0
    %617 = vmatpush1.bf16.msra.mxu0 0
    %618 = vmatprep.subr.bf16.mxu0 0
    %619 = vmatpush1.bf16.msra.mxu0 0
    %620 = vmatprep.subr.bf16.mxu0 0
    %621 = vmatpush1.bf16.msra.mxu0 0
    %622 = vmatprep.subr.bf16.mxu0 0
    %623 = vmatpush1.bf16.msra.mxu0 0
    %624 = vmatprep.subr.bf16.mxu0 0
    %625 = vmatpush1.bf16.msra.mxu0 0
    %626 = vmatprep.subr.bf16.mxu0 0
    %627 = vmatpush1.bf16.msra.mxu0 0
    %628 = vmatprep.subr.bf16.mxu0 0
    %629 = vmatpush1.bf16.msra.mxu0 0
    %630 = vmatprep.subr.bf16.mxu0 0
    %631 = vmatpush1.bf16.msra.mxu0 0
    %632 = vmatprep.subr.bf16.mxu0 0
    %633 = vmatpush1.bf16.msra.mxu0 0
    %634 = vmatprep.subr.bf16.mxu0 0
    %635 = vmatpush1.bf16.msra.mxu0 0
    %636 = vmatprep.subr.bf16.mxu0 0
    %637 = vmatpush1.bf16.msra.mxu0 0
    %638 = vmatprep.subr.bf16.mxu0 0
    %639 = vmatpush1.bf16.msra.mxu0 0
    %640 = vmatprep.mubr.bf16.mxu0 0
    %641 = vmatmul.mubr.bf16.gmra.mrb[0].mxu0 %v606
    %v642 = vpop.f32.mrb[0].mxu0
    %v643 = vadd.f32 %v592, %v642
    %v644 = vpop.f32.mrb[0].mxu0
    %v645 = vpop.f32.mrb[0].mxu0
    %v646 = vadd.f32 %v592, %v645
    %v647 = vpop.f32.mrb[0].mxu0
    %648 = vdwg.mxu0
    %651 = vrot.lane.b32.xlu0 %v350, 64
    %v652 = vpop.permute.xlu0 %651
    %653 = vrot.lane.b32.xlu0 %v353, 64
    %v654 = vpop.permute.xlu0 %653
    %v657 = vsel %vm103, %v643, %v652
    %v658 = vsel %vm103, %v646, %v654
    %vm659 = vcmask 785408
    %v660 = vsel %vm659, %v657, 0.0
    %v661 = vsel %vm659, %v658, 0.0
    %662 = vst [vmem:[#allocation7] sm:$0xff] %v660
    %663 = vst [vmem:[#allocation7 + $0x8] sm:$0xff] %v661
    // Predicated region
    $region42: #{tpu_custom_call.1} parent=1 // pred_check
      _
    $region43: #{tpu_custom_call.1} parent=1 // pred_check_branch
      %665 = sbr.rel (0) target = $region45
    $region44: #{tpu_custom_call.1} parent=1 // pred_region
      %s667 = ssub.s32 256, 256
      %668 = vsyncadd [#allocation4], %s667
      %s669 = sshll.u32 [#allocation7], 4
      %s670 = int_to_ptr.vmem [resolvable:$true] %s669
      %675 = dma.vmem_to_hbm [thread:$0]  %s670, 256, %s8, [#allocation4], 128, 128, 8
    $region45: #{tpu_custom_call.1} parent=1 // pred_fallthru
      _
    // Predicated region
    $region46: #{tpu_custom_call.1} parent=1 // pred_check
      _
    $region47: #{tpu_custom_call.1} parent=1 // pred_check_branch
      %677 = sbr.rel (0) target = $region49
    $region48: #{tpu_custom_call.1} parent=1 // pred_region
      %678 = dma.done [#allocation4], 256
    $region49: #{tpu_custom_call.1} parent=1 // pred_fallthru
      _
    %679 = vsyncpa [#allocation3], 1
    %680 = vsyncpa [#allocation6], 1
    %681 = vsyncpa [#allocation4], 1

</llo_original>
